<compile_context>
chip_gen: v7x
topology: tpu7x:2x2x1
jax: 0.10.0
libtpu: 0.0.40
codegen_flags: <defaults>
</compile_context>

<pallas_src>
import jax
import jax.numpy as jnp
from jax import lax
from jax.experimental import pallas as pl
from jax.experimental.pallas import tpu as pltpu

IN_DIM = 10
HID_DIM = 20
OUT_DIM = 1

# Inner lane-chunk: batch elements processed per inner-loop step.
_CHUNK = 2048


def _pick_tile_and_vmem_limit():
    """Generation-aware max batch tile + scoped-VMEM limit.

    VMEM per batch element of a tile (f32, double-buffered):
      x block (TM, 10): lanes pad 10 -> 128  => 512 B/elem per buffer
      out block (1, TM): sublanes pad 1 -> 8 =>  32 B/elem per buffer
    => ~1.1 KiB / element plus ~2 MiB of chunk temps / weights.
    """
    try:
        vmem_cap = int(pltpu.get_tpu_info().vmem_capacity_bytes)
    except Exception:
        vmem_cap = 64 * 1024 * 1024  # conservative fallback (v7x per-TC VMEM)
    if vmem_cap >= 100 * 1024 * 1024:
        # v5e / v6e: 128 MiB physical VMEM. ~36 MiB of buffers at TM=32K, so
        # raise the scoped limit above the 16 / 32 MiB defaults.
        return 32768, 64 * 1024 * 1024
    # v7x: 64 MiB per TensorCore -> ~19 MiB of buffers, default 32 MiB scope.
    return 16384, 32 * 1024 * 1024


def _mlp_kernel(x_ref, w1t_ref, b1_ref, w2_ref, b2_ref, o_ref):
    tm = o_ref.shape[-1]
    chunk = tm if tm < _CHUNK else _CHUNK
    n_chunks = tm // chunk          # tm is constructed as a multiple of chunk

    w1t = w1t_ref[...]              # [HID, IN]   loop-invariant, hoisted
    b1 = b1_ref[...]                # [HID, 1]    broadcasts over lanes
    w2 = w2_ref[...]                # [HID, 1]    broadcasts over lanes
    b2 = b2_ref[0, 0]               # scalar output bias from SMEM

    def compute_chunk(start, size):
        xc = x_ref[pl.ds(start, size), :]                      # [size, IN]
        # fc1 with the transpose folded into the MXU: contract trailing dims
        # of both operands (w1t[h,k] . xc[n,k] -> [h, n]); batch lands on lanes.
        h = lax.dot_general(w1t, xc, (((1,), (1,)), ((), ())),
                            preferred_element_type=jnp.float32)
        h = jnp.maximum(h + b1, 0.0)                           # [HID, size]
        # fc2 as VPU multiply + sublane reduce (avoids an M=1 MXU pass).
        y = jnp.sum(h * w2, axis=0, keepdims=True) + b2        # [1, size]
        o_ref[:, pl.ds(start, size)] = y

    if n_chunks == 1:
        compute_chunk(0, tm)
    else:
        def body(c, carry):
            start = pl.multiple_of(c * chunk, chunk)
            compute_chunk(start, chunk)
            return carry
        lax.fori_loop(0, n_chunks, body, 0)


def causal_inference_nn(x, w1, b1, w2, b2):
    """x: [B, IN_DIM] -> [B, OUT_DIM].  Weights stored [in, out] (nn.Linear^T)."""
    B = x.shape[0]
    max_tm, vmem_limit = _pick_tile_and_vmem_limit()
    if B <= _CHUNK:
        tm = B                                   # single block, single chunk
    elif B <= max_tm:
        tm = _CHUNK * (B // _CHUNK)              # multiple of the inner chunk
    else:
        tm = max_tm
    grid = (pl.cdiv(B, tm),)

    # Tiny parameter reshapes only — x itself is consumed untransposed.
    w1t = w1.T                                   # [HID, IN]
    b1_col = b1.reshape(HID_DIM, 1)
    w2_col = w2.reshape(HID_DIM, OUT_DIM)        # already column shaped
    b2_2d = b2.reshape(1, 1)

    flops = 2 * B * (IN_DIM * HID_DIM + HID_DIM * OUT_DIM)
    bytes_accessed = 4 * (B * (IN_DIM + OUT_DIM)
                          + IN_DIM * HID_DIM + HID_DIM
                          + HID_DIM * OUT_DIM + OUT_DIM)

    out_t = pl.pallas_call(
        _mlp_kernel,
        out_shape=jax.ShapeDtypeStruct((OUT_DIM, B), jnp.float32),
        grid=grid,
        in_specs=[
            # x streamed batch-major; weights/biases VMEM-resident across steps.
            pl.BlockSpec((tm, IN_DIM), lambda i: (i, 0)),
            pl.BlockSpec((HID_DIM, IN_DIM), lambda i: (0, 0)),
            pl.BlockSpec((HID_DIM, 1), lambda i: (0, 0)),
            pl.BlockSpec((HID_DIM, OUT_DIM), lambda i: (0, 0)),
            pl.BlockSpec(memory_space=pltpu.MemorySpace.SMEM),  # scalar b2
        ],
        # Feature-major output block (1, tm): lane-dense stores.
        out_specs=pl.BlockSpec((OUT_DIM, tm), lambda i: (0, i)),
        compiler_params=pltpu.CompilerParams(
            # TODO(synk): on v7x verify both TensorCores pick up grid steps in
            # the profile; if not, switch this axis to pltpu.CORE_PARALLEL.
            dimension_semantics=("parallel",),
            vmem_limit_bytes=vmem_limit),
        cost_estimate=pl.CostEstimate(
            flops=flops, transcendentals=0, bytes_accessed=bytes_accessed),
    )(x, w1t, b1_col, w2_col, b2_2d)

    # [1, B] -> [B, 1]: free reshape (degenerate leading dim).
    return out_t.reshape(B, OUT_DIM)


def init_params(key):
    """Deterministic init mimicking nn.Linear's U(-1/sqrt(fan_in), 1/sqrt(fan_in))."""
    k1, k2, k3, k4 = jax.random.split(key, 4)
    bound1 = 1.0 / jnp.sqrt(jnp.float32(IN_DIM))
    bound2 = 1.0 / jnp.sqrt(jnp.float32(HID_DIM))
    w1 = jax.random.uniform(k1, (IN_DIM, HID_DIM), jnp.float32, -bound1, bound1)
    b1 = jax.random.uniform(k2, (HID_DIM,), jnp.float32, -bound1, bound1)
    w2 = jax.random.uniform(k3, (HID_DIM, OUT_DIM), jnp.float32, -bound2, bound2)
    b2 = jax.random.uniform(k4, (OUT_DIM,), jnp.float32, -bound2, bound2)
    return w1, b1, w2, b2


if __name__ == "__main__":
    key = jax.random.PRNGKey(0)
    kx, kp = jax.random.split(key)
    w1, b1, w2, b2 = init_params(kp)

    # Small smoke test (single block) + a tiled test exercising the batch grid,
    # the inner chunk loop, and a partial trailing block.
    for B in (8, 6000):
        x = jax.random.normal(jax.random.fold_in(kx, B), (B, IN_DIM), jnp.float32)
        out = jax.block_until_ready(causal_inference_nn(x, w1, b1, w2, b2))
        ref = jnp.maximum(x @ w1 + b1, 0.0) @ w2 + b2
        assert out.shape == (B, OUT_DIM)
        assert jnp.allclose(out, ref, atol=1e-4, rtol=1e-4), f"mismatch at B={B}"

    print("KERNEL_OK")
</pallas_src>

<mosaic_0001>
module attributes {stable_mosaic.version = 11 : i64} {
  func.func @_mlp_kernel(%arg0: i32, %arg1: memref<8x10xf32, #tpu.memory_space<vmem>>, %arg2: memref<20x10xf32, #tpu.memory_space<vmem>>, %arg3: memref<20x1xf32, #tpu.memory_space<vmem>>, %arg4: memref<20x1xf32, #tpu.memory_space<vmem>>, %arg5: memref<1x1xf32, #tpu.memory_space<smem>>, %arg6: memref<1x8xf32, #tpu.memory_space<vmem>>) attributes {dimension_semantics = [#tpu.dimension_semantics<parallel>], iteration_bounds = array<i64: 1>, scalar_prefetch = 0 : i64, scratch_operands = 0 : i64, tpu.core_type = #tpu.core_type<tc>, window_params = [{transform_indices = @transform_0, window_bounds = array<i64: 8, 10>}, {pipeline_mode = #tpu.pipeline_mode<synchronous>, transform_indices = @transform_1, window_bounds = array<i64: 20, 10>}, {pipeline_mode = #tpu.pipeline_mode<synchronous>, transform_indices = @transform_2, window_bounds = array<i64: 20, 1>}, {pipeline_mode = #tpu.pipeline_mode<synchronous>, transform_indices = @transform_3, window_bounds = array<i64: 20, 1>}, {transform_indices = @transform_4, window_bounds = array<i64: 1, 1>}, {transform_indices = @transform_5, window_bounds = array<i64: 1, 8>}]} {
    %c0 = arith.constant 0 : index
    %c0_0 = arith.constant 0 : index
    %0 = vector.load %arg2[%c0, %c0_0] : memref<20x10xf32, #tpu.memory_space<vmem>>, vector<20x10xf32>
    %c0_1 = arith.constant 0 : index
    %c0_2 = arith.constant 0 : index
    %1 = vector.load %arg3[%c0_1, %c0_2] : memref<20x1xf32, #tpu.memory_space<vmem>>, vector<20x1xf32>
    %c0_3 = arith.constant 0 : index
    %c0_4 = arith.constant 0 : index
    %2 = vector.load %arg4[%c0_3, %c0_4] : memref<20x1xf32, #tpu.memory_space<vmem>>, vector<20x1xf32>
    %c0_5 = arith.constant 0 : index
    %c0_6 = arith.constant 0 : index
    %3 = memref.load %arg5[%c0_5, %c0_6] : memref<1x1xf32, #tpu.memory_space<smem>>
    %c0_7 = arith.constant 0 : index
    %c0_8 = arith.constant 0 : index
    %4 = vector.load %arg1[%c0_7, %c0_8] : memref<8x10xf32, #tpu.memory_space<vmem>>, vector<8x10xf32>
    %cst = arith.constant dense<0.000000e+00> : vector<20x8xf32>
    %5 = tpu.matmul %0, %4, %cst {dimension_numbers = #tpu.dot_dimension_numbers<[1], [1], [0], [0], [0, 0, 1, 0], [], []>} : vector<20x10xf32>, vector<8x10xf32>, vector<20x8xf32> -> vector<20x8xf32>
    %6 = vector.broadcast %1 : vector<20x1xf32> to vector<20x8xf32>
    %7 = arith.addf %5, %6 : vector<20x8xf32>
    %cst_9 = arith.constant 0.000000e+00 : f32
    %8 = vector.broadcast %cst_9 : f32 to vector<20x8xf32>
    %9 = arith.maximumf %7, %8 : vector<20x8xf32>
    %10 = vector.broadcast %2 : vector<20x1xf32> to vector<20x8xf32>
    %11 = arith.mulf %9, %10 : vector<20x8xf32>
    %cst_10 = arith.constant dense<0.000000e+00> : vector<8xf32>
    %12 = vector.multi_reduction <add>, %11, %cst_10 [0] : vector<20x8xf32> to vector<8xf32>
    %13 = vector.shape_cast %12 : vector<8xf32> to vector<1x8xf32>
    %14 = vector.broadcast %3 : f32 to vector<1x8xf32>
    %15 = arith.addf %13, %14 : vector<1x8xf32>
    %c0_11 = arith.constant 0 : index
    %c0_12 = arith.constant 0 : index
    %16 = vector.load %arg6[%c0_11, %c0_12] : memref<1x8xf32, #tpu.memory_space<vmem>>, vector<1x8xf32>
    tpu.vector_store %arg6[%c0_11, %c0_12], %15 {strides = array<i32>} : memref<1x8xf32, #tpu.memory_space<vmem>>, vector<1x8xf32>,
    return
  }
  func.func @transform_0(%arg0: i32) -> (i32, i32) {
    %c0_i32 = arith.constant 0 : i32
    %c0_i32_0 = arith.constant 0 : i32
    return %arg0, %c0_i32 : i32, i32
  }
  func.func @transform_1(%arg0: i32) -> (i32, i32) {
    %c0_i32 = arith.constant 0 : i32
    %c0_i32_0 = arith.constant 0 : i32
    %c0_i32_1 = arith.constant 0 : i32
    return %c0_i32, %c0_i32_0 : i32, i32
  }
  func.func @transform_2(%arg0: i32) -> (i32, i32) {
    %c0_i32 = arith.constant 0 : i32
    %c0_i32_0 = arith.constant 0 : i32
    %c0_i32_1 = arith.constant 0 : i32
    return %c0_i32, %c0_i32_0 : i32, i32
  }
  func.func @transform_3(%arg0: i32) -> (i32, i32) {
    %c0_i32 = arith.constant 0 : i32
    %c0_i32_0 = arith.constant 0 : i32
    %c0_i32_1 = arith.constant 0 : i32
    return %c0_i32, %c0_i32_0 : i32, i32
  }
  func.func @transform_4(%arg0: i32) -> (i32, i32) {
    %c0_i32 = arith.constant 0 : i32
    %c0_i32_0 = arith.constant 0 : i32
    %c0_i32_1 = arith.constant 0 : i32
    return %c0_i32, %c0_i32_0 : i32, i32
  }
  func.func @transform_5(%arg0: i32) -> (i32, i32) {
    %c0_i32 = arith.constant 0 : i32
    %c0_i32_0 = arith.constant 0 : i32
    return %c0_i32, %arg0 : i32, i32
  }
}

</mosaic_0001>

<llo_original>
// kernel: tpu_custom_call.1
$region0: #{tpu_custom_call.1}
  #allocation0 [shape = 'u32[]', space=smem, size = 0x4, offset = 0x4, fixed_abs, tag = 'smem constant byte address 0x4 - core index']
  #allocation1 [shape = 'u32[144,128]{1,0:T(1,128)}', space=vmem, size = 0x12000, scoped, tag = 'internal scratch']
  #allocation2 [shape = 'f32[1,1]{1,0:T(1,128)S(6)}', space=smem, size = 0x200, scoped, tag = 'scoped memory for tpu_custom_call.1']
  %s0 = inlined_call_operand.vmem [shape: f32[8,10], index: 0, kind: input, shape index: {}]
  %s1 = inlined_call_operand.vmem [shape: f32[20,10], index: 1, kind: input, shape index: {}]
  %s2 = inlined_call_operand.vmem [shape: f32[20,1], index: 2, kind: input, shape index: {}]
  %s3 = inlined_call_operand.vmem [shape: f32[20,1], index: 3, kind: input, shape index: {}]
  %s4 = inlined_call_operand.<no memory space> [shape: f32[1,1], index: 4, kind: input, shape index: {}]
  %s5 = inlined_call_operand.hbm [shape: f32[1,8], index: 5, kind: output, shape index: {}]
  %s6 = sld [smem:[#allocation0]]
  $region30: #{tpu_custom_call.1} parent=0
    _
  %s8 = ssub.s32 1, %s6
  %s9 = scalar_select 0, %s8, %s6
  %10 = sst [smem:[#allocation2]] %s4
  $region1: #{tpu_custom_call.1} parent=0
    #allocation3 [shape = 'u8[512]{0}', space=vmem, size = 0x400, scoped, tag = 'output window, operand 0, single buffered']
    #allocation4 [shape = 's32[1]{0}', space=sflag, size = 0x4, scoped, tag = 'scoped memory for tpu_custom_call.1']
    %11 = vsyncpa [#allocation4], 0
    // Predicated region
    $region2: #{tpu_custom_call.1} parent=1 // pred_check
      _
    $region3: #{tpu_custom_call.1} parent=1 // pred_check_branch
      %13 = sbr.rel (0) target = $region5
    $region4: #{tpu_custom_call.1} parent=1 // pred_region
      _
    $region5: #{tpu_custom_call.1} parent=1 // pred_fallthru
      _
    // Predicated region
    $region6: #{tpu_custom_call.1} parent=1 // pred_check
      _
    $region7: #{tpu_custom_call.1} parent=1 // pred_check_branch
      %15 = sbr.rel (0) target = $region9
    $region8: #{tpu_custom_call.1} parent=1 // pred_region
      _
    $region9: #{tpu_custom_call.1} parent=1 // pred_fallthru
      _
    // Predicated region
    $region10: #{tpu_custom_call.1} parent=1 // pred_check
      _
    $region11: #{tpu_custom_call.1} parent=1 // pred_check_branch
      %17 = sbr.rel (0) target = $region13
    $region12: #{tpu_custom_call.1} parent=1 // pred_region
      _
    $region13: #{tpu_custom_call.1} parent=1 // pred_fallthru
      _
    // Predicated region
    $region14: #{tpu_custom_call.1} parent=1 // pred_check
      _
    $region15: #{tpu_custom_call.1} parent=1 // pred_check_branch
      %19 = sbr.rel (0) target = $region17
    $region16: #{tpu_custom_call.1} parent=1 // pred_region
      _
    $region17: #{tpu_custom_call.1} parent=1 // pred_fallthru
      _
    // Predicated region
    $region18: #{tpu_custom_call.1} parent=1 // pred_check
      _
    $region19: #{tpu_custom_call.1} parent=1 // pred_check_branch
      %21 = sbr.rel (0) target = $region21
    $region20: #{tpu_custom_call.1} parent=1 // pred_region
      _
    $region21: #{tpu_custom_call.1} parent=1 // pred_fallthru
      _
    %v22 = vld [vmem:[%s1] sm:$0xff]
    %v23 = vld [vmem:[%s1 + $0x8] sm:$0xff]
    %v24 = vld [vmem:[%s1 + $0x10] sm:$0xf]
    %v25 = vld [vmem:[%s2] sm:$0xff]
    %v26 = vld [vmem:[%s2 + $0x8] sm:$0xff]
    %v27 = vld [vmem:[%s2 + $0x10] sm:$0xf]
    %v28 = vld [vmem:[%s3] sm:$0xff]
    %v29 = vld [vmem:[%s3 + $0x8] sm:$0xff]
    %v30 = vld [vmem:[%s3 + $0x10] sm:$0xf]
    %s31 = sld [smem:[#allocation2]]
    %v32 = vld [vmem:[%s0] sm:$0xff]
    %34 = vset.pattern.permute.xlu0 0
    %35 = vperm.xlu0 %34, %v25
    %v36 = vpop.permute.xlu0 %35
    %39 = vset.pattern.permute.xlu0 0
    %40 = vperm.xlu0 %39, %v26
    %v41 = vpop.permute.xlu0 %40
    %44 = vset.pattern.permute.xlu0 0
    %45 = vperm.xlu0 %44, %v27
    %v46 = vpop.permute.xlu0 %45
    %vm48 = vcmask 80896
    %v50 = vsel %vm48, %v22, 0
    %v53 = vsel %vm48, %v23, 0
    %v56 = vsel %vm48, %v24, 0
    %v59 = vsel %vm48, %v32, 0
    %61 = vmatprep.subr.mxu0 0.0
    %62 = vmatpush1.xpose.msra.mxu0 %v59
    %63 = vmatprep.subr.mxu0 0.0
    %64 = vmatpush1.xpose.msra.mxu0 0.0
    %65 = vmatprep.subr.mxu0 0.0
    %66 = vmatpush1.xpose.msra.mxu0 0.0
    %67 = vmatprep.subr.mxu0 0.0
    %68 = vmatpush1.xpose.msra.mxu0 0.0
    %69 = vmatprep.subr.mxu0 0.0
    %70 = vmatpush1.xpose.msra.mxu0 0.0
    %71 = vmatprep.subr.mxu0 0.0
    %72 = vmatpush1.xpose.msra.mxu0 0.0
    %73 = vmatprep.subr.mxu0 0.0
    %74 = vmatpush1.xpose.msra.mxu0 0.0
    %75 = vmatprep.subr.mxu0 0.0
    %76 = vmatpush1.xpose.msra.mxu0 0.0
    %77 = vmatprep.subr.mxu0 0.0
    %78 = vmatpush1.xpose.msra.mxu0 0.0
    %79 = vmatprep.subr.mxu0 0.0
    %80 = vmatpush1.xpose.msra.mxu0 0.0
    %81 = vmatprep.subr.mxu0 0.0
    %82 = vmatpush1.xpose.msra.mxu0 0.0
    %83 = vmatprep.subr.mxu0 0.0
    %84 = vmatpush1.xpose.msra.mxu0 0.0
    %85 = vmatprep.subr.mxu0 0.0
    %86 = vmatpush1.xpose.msra.mxu0 0.0
    %87 = vmatprep.subr.mxu0 0.0
    %88 = vmatpush1.xpose.msra.mxu0 0.0
    %89 = vmatprep.subr.mxu0 0.0
    %90 = vmatpush1.xpose.msra.mxu0 0.0
    %91 = vmatprep.subr.mxu0 0.0
    %92 = vmatpush1.xpose.msra.mxu0 0.0
    %93 = vmatprep.subr.mxu0 0.0
    %94 = vmatpush1.xpose.msra.mxu0 0.0
    %95 = vmatprep.subr.mxu0 0.0
    %96 = vmatpush1.xpose.msra.mxu0 0.0
    %97 = vmatprep.subr.mxu0 0.0
    %98 = vmatpush1.xpose.msra.mxu0 0.0
    %99 = vmatprep.subr.mxu0 0.0
    %100 = vmatpush1.xpose.msra.mxu0 0.0
    %101 = vmatprep.subr.mxu0 0.0
    %102 = vmatpush1.xpose.msra.mxu0 0.0
    %103 = vmatprep.subr.mxu0 0.0
    %104 = vmatpush1.xpose.msra.mxu0 0.0
    %105 = vmatprep.subr.mxu0 0.0
    %106 = vmatpush1.xpose.msra.mxu0 0.0
    %107 = vmatprep.subr.mxu0 0.0
    %108 = vmatpush1.xpose.msra.mxu0 0.0
    %109 = vmatprep.subr.mxu0 0.0
    %110 = vmatpush1.xpose.msra.mxu0 0.0
    %111 = vmatprep.subr.mxu0 0.0
    %112 = vmatpush1.xpose.msra.mxu0 0.0
    %113 = vmatprep.subr.mxu0 0.0
    %114 = vmatpush1.xpose.msra.mxu0 0.0
    %115 = vmatprep.subr.mxu0 0.0
    %116 = vmatpush1.xpose.msra.mxu0 0.0
    %117 = vmatprep.subr.mxu0 0.0
    %118 = vmatpush1.xpose.msra.mxu0 0.0
    %119 = vmatprep.subr.mxu0 0.0
    %120 = vmatpush1.xpose.msra.mxu0 0.0
    %121 = vmatprep.subr.mxu0 0.0
    %122 = vmatpush1.xpose.msra.mxu0 0.0
    %123 = vmatprep.subr.mxu0 0.0
    %124 = vmatpush1.xpose.msra.mxu0 0.0
    %125 = vmatprep.mubr.f32.mxu0 0.0
    %126 = vmatmul.mubr.f32.gmra.mrb[0].mxu0 %v50
    %v127 = vpop.f32.mrb[0].mxu0
    %v128 = vadd.f32 %v36, %v127
    %v129 = vpop.f32.mrb[0].mxu0
    %130 = vmatprep.mubr.f32.mxu0 0.0
    %131 = vmatmul.mubr.f32.gmra.mrb[0].mxu0 %v53
    %v132 = vpop.f32.mrb[0].mxu0
    %v133 = vadd.f32 %v41, %v132
    %v134 = vpop.f32.mrb[0].mxu0
    %135 = vmatprep.mubr.f32.mxu0 0.0
    %136 = vmatmul.mubr.f32.gmra.mrb[0].mxu0 %v56
    %v137 = vpop.f32.mrb[0].mxu0
    %v138 = vadd.f32 %v46, %v137
    %v139 = vpop.f32.mrb[0].mxu0
    %140 = vdwg.mxu0
    %v141 = vmax.f32 %v128, 0.0
    %v142 = vmax.f32 %v133, 0.0
    %v143 = vmax.f32 %v138, 0.0
    %145 = vset.pattern.permute.xlu0 0
    %146 = vperm.xlu0 %145, %v28
    %v147 = vpop.permute.xlu0 %146
    %150 = vset.pattern.permute.xlu0 0
    %151 = vperm.xlu0 %150, %v29
    %v152 = vpop.permute.xlu0 %151
    %155 = vset.pattern.permute.xlu0 0
    %156 = vperm.xlu0 %155, %v30
    %v157 = vpop.permute.xlu0 %156
    %v159 = vmul.f32 %v141, %v147
    %v160 = vmul.f32 %v142, %v152
    %v161 = vmul.f32 %v143, %v157
    %vm162 = vcmask 64512
    %v163 = vsel %vm162, %v159, 0.0
    %v164 = vsel %vm162, %v160, 0.0
    %v165 = vadd.f32 %v163, %v164
    %vm166 = vcmask 60416
    %v167 = vsel %vm166, %v161, 0.0
    %v168 = vadd.f32 %v165, %v167
    %v169 = vrot.slane %v168, 4
    %v170 = vadd.f32 %v168, %v169
    %v171 = vrot.slane %v170, 2
    %v172 = vadd.f32 %v170, %v171
    %v173 = vrot.slane %v172, 1
    %v174 = vadd.f32 %v172, %v173
    %v175 = vstv %s31
    %v176 = vadd.f32 %v174, %v175
    %vm177 = vcmask 57344
    %178 = vst.msk [vmem:[#allocation3] sm:$0x1] %vm177, %v176
    // Predicated region
    $region22: #{tpu_custom_call.1} parent=1 // pred_check
      _
    $region23: #{tpu_custom_call.1} parent=1 // pred_check_branch
      %180 = sbr.rel (0) target = $region25
    $region24: #{tpu_custom_call.1} parent=1 // pred_region
      %s182 = ssub.s32 16, 16
      %183 = vsyncadd [#allocation4], %s182
      %s185 = sshll.u32 [#allocation3], 4
      %s186 = int_to_ptr.vmem [resolvable:$true] %s185
      %188 = dma.vmem_to_hbm [thread:$0]  %s186, 16, %s5, [#allocation4]
    $region25: #{tpu_custom_call.1} parent=1 // pred_fallthru
      _
    // Predicated region
    $region26: #{tpu_custom_call.1} parent=1 // pred_check
      _
    $region27: #{tpu_custom_call.1} parent=1 // pred_check_branch
      %190 = sbr.rel (0) target = $region29
    $region28: #{tpu_custom_call.1} parent=1 // pred_region
      %191 = dma.done [#allocation4], 16
    $region29: #{tpu_custom_call.1} parent=1 // pred_fallthru
      _
    %192 = vsyncpa [#allocation4], 1

</llo_original>
